<compile_context>
chip_gen: v7x
topology: tpu7x:2x2x1
jax: 0.10.0
libtpu: 0.0.40
codegen_flags: <defaults>
</compile_context>

<pallas_src>
import math

import jax
import jax.numpy as jnp
from jax import lax
from jax.experimental import pallas as pl
from jax.experimental.pallas import tpu as pltpu

CIN = 16
COUT = 16
K = 3
KC = K * K * K * CIN  # 432 = fused contraction depth


def _round_up(v, m):
    return ((v + m - 1) // m) * m


def _make_kernel(TD, Wp, Np):
    def kernel(w_ref, b_ref, xm_ref, xh_ref, o_ref):
        # w_ref : (1, KC)           bf16  fused conv weights, (kd,kh,kw,c) order
        # b_ref : (1,)        SMEM  f32   fused scalar bias
        # xm_ref: (1, TD, C, Lpix)  bf16  main depth block (input planes 0..TD-1)
        # xh_ref: (1, 2,  C, Lpix)  bf16  2-plane depth halo (input planes TD, TD+1)
        # o_ref : (1, TD, Np)       f32   lane-dense sigmoid outputs (q = h*Wp + w)
        w = w_ref[...]            # (1, KC)
        b = b_ref[0]              # scalar
        rows = []
        for t in range(TD):       # static unroll, TD <= 8
            pieces = []
            for kd in range(K):
                p = t + kd
                # static Python select between main block and halo block
                plane = xm_ref[0, p] if p < TD else xh_ref[0, p - TD]  # (C, Lpix)
                for kh in range(K):
                    for kw in range(K):
                        s = kh * Wp + kw                 # constant lane shift
                        pieces.append(plane[:, s:s + Np])  # (C, Np)
            patch = jnp.concatenate(pieces, axis=0)                      # (KC, Np)
            y = jnp.dot(w, patch, preferred_element_type=jnp.float32)    # (1, Np)
            y = y + b
            # sigmoid via EUP exp + approx reciprocal (keeps divide off the VPU)
            rows.append(pl.reciprocal(1.0 + jnp.exp(-y), approx=True))
        o_ref[0] = jnp.concatenate(rows, axis=0)                         # (TD, Np)

    return kernel


@jax.jit
def aoc_top_forward(x_ncdhw, w1_oidhw, b1, w2_oidhw, b2):
    """Pallas implementation of AoCTop.forward. x_ncdhw: (N, 16, D, H, W) float32."""
    N, C, D, H, W = x_ncdhw.shape
    assert C == CIN and D > 2
    d_out = D - 2
    Hp, Wp = H + 2, W + 2

    # ---- exact weight fusion of the two convs (no activation between them) ----
    w2v = w2_oidhw.reshape(COUT)                                    # (16,)
    wf = jnp.einsum("oidhw,o->dhwi", w1_oidhw, w2v)                 # (3,3,3,16)
    wf = wf.reshape(1, KC).astype(jnp.bfloat16)                     # (1, 432)
    bf = (jnp.dot(b1, w2v) + b2[0]).reshape(1).astype(jnp.float32)

    # ---- depth blocking (TD even so the 2-plane halo lands on a block boundary) ----
    TD = d_out if d_out <= 8 else 8
    if TD % 2:
        TD += 1
    n_db = -(-d_out // TD)          # ceil(d_out / TD)
    D_pad = n_db * TD + 2           # input depth incl. halo for the last block

    # lane geometry: outputs on an H x Wp grid so each (kh,kw) tap is a constant
    # lane shift of the flattened padded plane; everything 128-multiple.
    Np = _round_up(H * Wp, 128)                 # output lane width per plane
    Lpix = Np + _round_up(2 * Wp + 2, 128)      # input lane width (covers max shift)

    # ---- cheap raw-input relayout: bf16, 16 channels only (no 27x inflation) ----
    xb = jnp.transpose(x_ncdhw.astype(jnp.bfloat16), (0, 2, 1, 3, 4))   # (N,D,C,H,W)
    xb = jnp.pad(xb, ((0, 0), (0, D_pad - D), (0, 0), (1, 1), (1, 1)))  # depth tail, H, W
    xb = xb.reshape(N, D_pad, CIN, Hp * Wp)
    xb = jnp.pad(xb, ((0, 0), (0, 0), (0, 0), (0, Lpix - Hp * Wp)))     # lane pad

    kernel = _make_kernel(TD, Wp, Np)
    half_td = TD // 2

    out = pl.pallas_call(
        kernel,
        out_shape=jax.ShapeDtypeStruct((N, n_db * TD, Np), jnp.float32),
        grid_spec=pltpu.PrefetchScalarGridSpec(
            num_scalar_prefetch=0,
            grid=(N, n_db),
            in_specs=[
                pl.BlockSpec((1, KC), lambda n, j: (0, 0)),
                pl.BlockSpec(memory_space=pltpu.MemorySpace.SMEM),
                # main depth block: input planes [j*TD, (j+1)*TD)
                pl.BlockSpec((1, TD, CIN, Lpix), lambda n, j: (n, j, 0, 0)),
                # 2-plane depth halo: input planes [(j+1)*TD, (j+1)*TD + 2)
                pl.BlockSpec((1, 2, CIN, Lpix),
                             lambda n, j: (n, (j + 1) * half_td, 0, 0)),
            ],
            out_specs=pl.BlockSpec((1, TD, Np), lambda n, j: (n, j, 0)),
        ),
        compiler_params=pltpu.CompilerParams(
            dimension_semantics=("parallel", "parallel"),
            vmem_limit_bytes=32 * 1024 * 1024,
        ),
    )(wf, bf, xb, xb)

    # strip padding: valid outputs at q = h*Wp + w with h < H, w < W, depth < d_out
    out = out[:, :d_out, :H * Wp].reshape(N, d_out, H, Wp)[:, :, :, :W]
    # torch.squeeze drops ALL singleton dims -> match that contract exactly.
    return jnp.squeeze(out)


def aoc_top_reference(x_ncdhw, w1_oidhw, b1, w2_oidhw, b2):
    """Pure-JAX reference matching the PyTorch forward."""
    y = lax.conv_general_dilated(
        x_ncdhw, w1_oidhw, window_strides=(1, 1, 1),
        padding=[(0, 0), (1, 1), (1, 1)],
        dimension_numbers=("NCDHW", "OIDHW", "NCDHW"),
        precision=lax.Precision.HIGHEST,
    ) + b1[None, :, None, None, None]
    y = lax.conv_general_dilated(
        y, w2_oidhw, window_strides=(1, 1, 1),
        padding=[(0, 0), (0, 0), (0, 0)],
        dimension_numbers=("NCDHW", "OIDHW", "NCDHW"),
        precision=lax.Precision.HIGHEST,
    ) + b2[None, :, None, None, None]
    return jax.nn.sigmoid(jnp.squeeze(y))


if __name__ == "__main__":
    key = jax.random.PRNGKey(0)
    k_w1, k_b1, k_w2, k_b2, k_x = jax.random.split(key, 5)

    # Deterministic PyTorch-style uniform init.
    fan_in1 = CIN * K * K * K
    bound1 = 1.0 / math.sqrt(fan_in1)
    w1_oidhw = jax.random.uniform(k_w1, (COUT, CIN, K, K, K), jnp.float32,
                                  -bound1, bound1)
    b1 = jax.random.uniform(k_b1, (COUT,), jnp.float32, -bound1, bound1)

    fan_in2 = CIN
    bound2 = 1.0 / math.sqrt(fan_in2)
    w2_oidhw = jax.random.uniform(k_w2, (1, CIN, 1, 1, 1), jnp.float32,
                                  -bound2, bound2)
    b2 = jax.random.uniform(k_b2, (1,), jnp.float32, -bound2, bound2)

    # Small input consistent with the module: N=2, C=16, D=4, H=W=8.
    x = jax.random.normal(k_x, (2, CIN, 4, 8, 8), jnp.float32)

    out = jax.block_until_ready(aoc_top_forward(x, w1_oidhw, b1, w2_oidhw, b2))
    ref = jax.block_until_ready(aoc_top_reference(x, w1_oidhw, b1, w2_oidhw, b2))

    assert out.shape == ref.shape == (2, 2, 8, 8), (out.shape, ref.shape)
    max_err = float(jnp.max(jnp.abs(out - ref)))
    assert max_err < 2e-2, max_err
    print("KERNEL_OK")
</pallas_src>

<mosaic_0001>
module attributes {stable_mosaic.version = 11 : i64} {
  func.func @kernel(%arg0: i32, %arg1: i32, %arg2: memref<1x432xbf16, #tpu.memory_space<vmem>>, %arg3: memref<1xf32, #tpu.memory_space<smem>>, %arg4: memref<1x2x16x256xbf16, #tpu.memory_space<vmem>>, %arg5: memref<1x2x16x256xbf16, #tpu.memory_space<vmem>>, %arg6: memref<1x2x128xf32, #tpu.memory_space<vmem>>) attributes {dimension_semantics = [#tpu.dimension_semantics<parallel>, #tpu.dimension_semantics<parallel>], iteration_bounds = array<i64: 2, 1>, scalar_prefetch = 0 : i64, scratch_operands = 0 : i64, tpu.core_type = #tpu.core_type<tc>, window_params = [{pipeline_mode = #tpu.pipeline_mode<synchronous>, transform_indices = @transform_0, window_bounds = array<i64: 1, 432>}, {transform_indices = @transform_1, window_bounds = array<i64: 1>}, {transform_indices = @transform_2, window_bounds = array<i64: 1, 2, 16, 256>}, {transform_indices = @transform_3, window_bounds = array<i64: 1, 2, 16, 256>}, {transform_indices = @transform_4, window_bounds = array<i64: 1, 2, 128>}]} {
    %c0 = arith.constant 0 : index
    %c0_0 = arith.constant 0 : index
    %0 = vector.load %arg2[%c0, %c0_0] : memref<1x432xbf16, #tpu.memory_space<vmem>>, vector<1x432xbf16>
    %c0_1 = arith.constant 0 : index
    %1 = memref.load %arg3[%c0_1] : memref<1xf32, #tpu.memory_space<smem>>
    %c0_2 = arith.constant 0 : index
    %c0_3 = arith.constant 0 : index
    %c0_4 = arith.constant 0 : index
    %c0_5 = arith.constant 0 : index
    %2 = vector.load %arg4[%c0_2, %c0_3, %c0_4, %c0_5] : memref<1x2x16x256xbf16, #tpu.memory_space<vmem>>, vector<1x1x16x256xbf16>
    %3 = vector.shape_cast %2 : vector<1x1x16x256xbf16> to vector<16x256xbf16>
    %4 = vector.extract_strided_slice %3 {offsets = [0, 0], sizes = [16, 128], strides = [1, 1]} : vector<16x256xbf16> to vector<16x128xbf16>
    %5 = vector.extract_strided_slice %3 {offsets = [0, 1], sizes = [16, 128], strides = [1, 1]} : vector<16x256xbf16> to vector<16x128xbf16>
    %6 = vector.extract_strided_slice %3 {offsets = [0, 2], sizes = [16, 128], strides = [1, 1]} : vector<16x256xbf16> to vector<16x128xbf16>
    %7 = vector.extract_strided_slice %3 {offsets = [0, 10], sizes = [16, 128], strides = [1, 1]} : vector<16x256xbf16> to vector<16x128xbf16>
    %8 = vector.extract_strided_slice %3 {offsets = [0, 11], sizes = [16, 128], strides = [1, 1]} : vector<16x256xbf16> to vector<16x128xbf16>
    %9 = vector.extract_strided_slice %3 {offsets = [0, 12], sizes = [16, 128], strides = [1, 1]} : vector<16x256xbf16> to vector<16x128xbf16>
    %10 = vector.extract_strided_slice %3 {offsets = [0, 20], sizes = [16, 128], strides = [1, 1]} : vector<16x256xbf16> to vector<16x128xbf16>
    %11 = vector.extract_strided_slice %3 {offsets = [0, 21], sizes = [16, 128], strides = [1, 1]} : vector<16x256xbf16> to vector<16x128xbf16>
    %12 = vector.extract_strided_slice %3 {offsets = [0, 22], sizes = [16, 128], strides = [1, 1]} : vector<16x256xbf16> to vector<16x128xbf16>
    %c0_6 = arith.constant 0 : index
    %c1 = arith.constant 1 : index
    %c0_7 = arith.constant 0 : index
    %c0_8 = arith.constant 0 : index
    %13 = vector.load %arg4[%c0_6, %c1, %c0_7, %c0_8] : memref<1x2x16x256xbf16, #tpu.memory_space<vmem>>, vector<1x1x16x256xbf16>
    %14 = vector.shape_cast %13 : vector<1x1x16x256xbf16> to vector<16x256xbf16>
    %15 = vector.extract_strided_slice %14 {offsets = [0, 0], sizes = [16, 128], strides = [1, 1]} : vector<16x256xbf16> to vector<16x128xbf16>
    %16 = vector.extract_strided_slice %14 {offsets = [0, 1], sizes = [16, 128], strides = [1, 1]} : vector<16x256xbf16> to vector<16x128xbf16>
    %17 = vector.extract_strided_slice %14 {offsets = [0, 2], sizes = [16, 128], strides = [1, 1]} : vector<16x256xbf16> to vector<16x128xbf16>
    %18 = vector.extract_strided_slice %14 {offsets = [0, 10], sizes = [16, 128], strides = [1, 1]} : vector<16x256xbf16> to vector<16x128xbf16>
    %19 = vector.extract_strided_slice %14 {offsets = [0, 11], sizes = [16, 128], strides = [1, 1]} : vector<16x256xbf16> to vector<16x128xbf16>
    %20 = vector.extract_strided_slice %14 {offsets = [0, 12], sizes = [16, 128], strides = [1, 1]} : vector<16x256xbf16> to vector<16x128xbf16>
    %21 = vector.extract_strided_slice %14 {offsets = [0, 20], sizes = [16, 128], strides = [1, 1]} : vector<16x256xbf16> to vector<16x128xbf16>
    %22 = vector.extract_strided_slice %14 {offsets = [0, 21], sizes = [16, 128], strides = [1, 1]} : vector<16x256xbf16> to vector<16x128xbf16>
    %23 = vector.extract_strided_slice %14 {offsets = [0, 22], sizes = [16, 128], strides = [1, 1]} : vector<16x256xbf16> to vector<16x128xbf16>
    %c0_9 = arith.constant 0 : index
    %c0_10 = arith.constant 0 : index
    %c0_11 = arith.constant 0 : index
    %c0_12 = arith.constant 0 : index
    %24 = vector.load %arg5[%c0_9, %c0_10, %c0_11, %c0_12] : memref<1x2x16x256xbf16, #tpu.memory_space<vmem>>, vector<1x1x16x256xbf16>
    %25 = vector.shape_cast %24 : vector<1x1x16x256xbf16> to vector<16x256xbf16>
    %26 = vector.extract_strided_slice %25 {offsets = [0, 0], sizes = [16, 128], strides = [1, 1]} : vector<16x256xbf16> to vector<16x128xbf16>
    %27 = vector.extract_strided_slice %25 {offsets = [0, 1], sizes = [16, 128], strides = [1, 1]} : vector<16x256xbf16> to vector<16x128xbf16>
    %28 = vector.extract_strided_slice %25 {offsets = [0, 2], sizes = [16, 128], strides = [1, 1]} : vector<16x256xbf16> to vector<16x128xbf16>
    %29 = vector.extract_strided_slice %25 {offsets = [0, 10], sizes = [16, 128], strides = [1, 1]} : vector<16x256xbf16> to vector<16x128xbf16>
    %30 = vector.extract_strided_slice %25 {offsets = [0, 11], sizes = [16, 128], strides = [1, 1]} : vector<16x256xbf16> to vector<16x128xbf16>
    %31 = vector.extract_strided_slice %25 {offsets = [0, 12], sizes = [16, 128], strides = [1, 1]} : vector<16x256xbf16> to vector<16x128xbf16>
    %32 = vector.extract_strided_slice %25 {offsets = [0, 20], sizes = [16, 128], strides = [1, 1]} : vector<16x256xbf16> to vector<16x128xbf16>
    %33 = vector.extract_strided_slice %25 {offsets = [0, 21], sizes = [16, 128], strides = [1, 1]} : vector<16x256xbf16> to vector<16x128xbf16>
    %34 = vector.extract_strided_slice %25 {offsets = [0, 22], sizes = [16, 128], strides = [1, 1]} : vector<16x256xbf16> to vector<16x128xbf16>
    %35 = tpu.concatenate %4, %5, %6, %7, %8, %9, %10, %11, %12, %15, %16, %17, %18, %19, %20, %21 in 0 : vector<16x128xbf16>, vector<16x128xbf16>, vector<16x128xbf16>, vector<16x128xbf16>, vector<16x128xbf16>, vector<16x128xbf16>, vector<16x128xbf16>, vector<16x128xbf16>, vector<16x128xbf16>, vector<16x128xbf16>, vector<16x128xbf16>, vector<16x128xbf16>, vector<16x128xbf16>, vector<16x128xbf16>, vector<16x128xbf16>, vector<16x128xbf16> -> vector<256x128xbf16>
    %36 = tpu.concatenate %22, %23, %26, %27, %28, %29, %30, %31, %32, %33, %34 in 0 : vector<16x128xbf16>, vector<16x128xbf16>, vector<16x128xbf16>, vector<16x128xbf16>, vector<16x128xbf16>, vector<16x128xbf16>, vector<16x128xbf16>, vector<16x128xbf16>, vector<16x128xbf16>, vector<16x128xbf16>, vector<16x128xbf16> -> vector<176x128xbf16>
    %37 = tpu.concatenate %35, %36 in 0 : vector<256x128xbf16>, vector<176x128xbf16> -> vector<432x128xbf16>
    %cst = arith.constant dense<0.000000e+00> : vector<1x128xf32>
    %38 = tpu.matmul %0, %37, %cst {dimension_numbers = #tpu.dot_dimension_numbers<[1], [0], [0], [1], [0, 0, 1, 1], [], []>} : vector<1x432xbf16>, vector<432x128xbf16>, vector<1x128xf32> -> vector<1x128xf32>
    %39 = vector.broadcast %1 : f32 to vector<1x128xf32>
    %40 = arith.addf %38, %39 : vector<1x128xf32>
    %cst_13 = arith.constant 0.000000e+00 : f32
    %41 = vector.broadcast %cst_13 : f32 to vector<1x128xf32>
    %42 = arith.subf %41, %40 : vector<1x128xf32>
    %43 = math.exp %42 : vector<1x128xf32>
    %cst_14 = arith.constant 1.000000e+00 : f32
    %44 = vector.broadcast %cst_14 : f32 to vector<1x128xf32>
    %45 = arith.addf %44, %43 : vector<1x128xf32>
    %46 = tpu.reciprocal %45 {approx = true} : vector<1x128xf32> -> vector<1x128xf32>
    %c0_15 = arith.constant 0 : index
    %c1_16 = arith.constant 1 : index
    %c0_17 = arith.constant 0 : index
    %c0_18 = arith.constant 0 : index
    %47 = vector.load %arg4[%c0_15, %c1_16, %c0_17, %c0_18] : memref<1x2x16x256xbf16, #tpu.memory_space<vmem>>, vector<1x1x16x256xbf16>
    %48 = vector.shape_cast %47 : vector<1x1x16x256xbf16> to vector<16x256xbf16>
    %49 = vector.extract_strided_slice %48 {offsets = [0, 0], sizes = [16, 128], strides = [1, 1]} : vector<16x256xbf16> to vector<16x128xbf16>
    %50 = vector.extract_strided_slice %48 {offsets = [0, 1], sizes = [16, 128], strides = [1, 1]} : vector<16x256xbf16> to vector<16x128xbf16>
    %51 = vector.extract_strided_slice %48 {offsets = [0, 2], sizes = [16, 128], strides = [1, 1]} : vector<16x256xbf16> to vector<16x128xbf16>
    %52 = vector.extract_strided_slice %48 {offsets = [0, 10], sizes = [16, 128], strides = [1, 1]} : vector<16x256xbf16> to vector<16x128xbf16>
    %53 = vector.extract_strided_slice %48 {offsets = [0, 11], sizes = [16, 128], strides = [1, 1]} : vector<16x256xbf16> to vector<16x128xbf16>
    %54 = vector.extract_strided_slice %48 {offsets = [0, 12], sizes = [16, 128], strides = [1, 1]} : vector<16x256xbf16> to vector<16x128xbf16>
    %55 = vector.extract_strided_slice %48 {offsets = [0, 20], sizes = [16, 128], strides = [1, 1]} : vector<16x256xbf16> to vector<16x128xbf16>
    %56 = vector.extract_strided_slice %48 {offsets = [0, 21], sizes = [16, 128], strides = [1, 1]} : vector<16x256xbf16> to vector<16x128xbf16>
    %57 = vector.extract_strided_slice %48 {offsets = [0, 22], sizes = [16, 128], strides = [1, 1]} : vector<16x256xbf16> to vector<16x128xbf16>
    %c0_19 = arith.constant 0 : index
    %c0_20 = arith.constant 0 : index
    %c0_21 = arith.constant 0 : index
    %c0_22 = arith.constant 0 : index
    %58 = vector.load %arg5[%c0_19, %c0_20, %c0_21, %c0_22] : memref<1x2x16x256xbf16, #tpu.memory_space<vmem>>, vector<1x1x16x256xbf16>
    %59 = vector.shape_cast %58 : vector<1x1x16x256xbf16> to vector<16x256xbf16>
    %60 = vector.extract_strided_slice %59 {offsets = [0, 0], sizes = [16, 128], strides = [1, 1]} : vector<16x256xbf16> to vector<16x128xbf16>
    %61 = vector.extract_strided_slice %59 {offsets = [0, 1], sizes = [16, 128], strides = [1, 1]} : vector<16x256xbf16> to vector<16x128xbf16>
    %62 = vector.extract_strided_slice %59 {offsets = [0, 2], sizes = [16, 128], strides = [1, 1]} : vector<16x256xbf16> to vector<16x128xbf16>
    %63 = vector.extract_strided_slice %59 {offsets = [0, 10], sizes = [16, 128], strides = [1, 1]} : vector<16x256xbf16> to vector<16x128xbf16>
    %64 = vector.extract_strided_slice %59 {offsets = [0, 11], sizes = [16, 128], strides = [1, 1]} : vector<16x256xbf16> to vector<16x128xbf16>
    %65 = vector.extract_strided_slice %59 {offsets = [0, 12], sizes = [16, 128], strides = [1, 1]} : vector<16x256xbf16> to vector<16x128xbf16>
    %66 = vector.extract_strided_slice %59 {offsets = [0, 20], sizes = [16, 128], strides = [1, 1]} : vector<16x256xbf16> to vector<16x128xbf16>
    %67 = vector.extract_strided_slice %59 {offsets = [0, 21], sizes = [16, 128], strides = [1, 1]} : vector<16x256xbf16> to vector<16x128xbf16>
    %68 = vector.extract_strided_slice %59 {offsets = [0, 22], sizes = [16, 128], strides = [1, 1]} : vector<16x256xbf16> to vector<16x128xbf16>
    %c0_23 = arith.constant 0 : index
    %c1_24 = arith.constant 1 : index
    %c0_25 = arith.constant 0 : index
    %c0_26 = arith.constant 0 : index
    %69 = vector.load %arg5[%c0_23, %c1_24, %c0_25, %c0_26] : memref<1x2x16x256xbf16, #tpu.memory_space<vmem>>, vector<1x1x16x256xbf16>
    %70 = vector.shape_cast %69 : vector<1x1x16x256xbf16> to vector<16x256xbf16>
    %71 = vector.extract_strided_slice %70 {offsets = [0, 0], sizes = [16, 128], strides = [1, 1]} : vector<16x256xbf16> to vector<16x128xbf16>
    %72 = vector.extract_strided_slice %70 {offsets = [0, 1], sizes = [16, 128], strides = [1, 1]} : vector<16x256xbf16> to vector<16x128xbf16>
    %73 = vector.extract_strided_slice %70 {offsets = [0, 2], sizes = [16, 128], strides = [1, 1]} : vector<16x256xbf16> to vector<16x128xbf16>
    %74 = vector.extract_strided_slice %70 {offsets = [0, 10], sizes = [16, 128], strides = [1, 1]} : vector<16x256xbf16> to vector<16x128xbf16>
    %75 = vector.extract_strided_slice %70 {offsets = [0, 11], sizes = [16, 128], strides = [1, 1]} : vector<16x256xbf16> to vector<16x128xbf16>
    %76 = vector.extract_strided_slice %70 {offsets = [0, 12], sizes = [16, 128], strides = [1, 1]} : vector<16x256xbf16> to vector<16x128xbf16>
    %77 = vector.extract_strided_slice %70 {offsets = [0, 20], sizes = [16, 128], strides = [1, 1]} : vector<16x256xbf16> to vector<16x128xbf16>
    %78 = vector.extract_strided_slice %70 {offsets = [0, 21], sizes = [16, 128], strides = [1, 1]} : vector<16x256xbf16> to vector<16x128xbf16>
    %79 = vector.extract_strided_slice %70 {offsets = [0, 22], sizes = [16, 128], strides = [1, 1]} : vector<16x256xbf16> to vector<16x128xbf16>
    %80 = tpu.concatenate %49, %50, %51, %52, %53, %54, %55, %56, %57, %60, %61, %62, %63, %64, %65, %66 in 0 : vector<16x128xbf16>, vector<16x128xbf16>, vector<16x128xbf16>, vector<16x128xbf16>, vector<16x128xbf16>, vector<16x128xbf16>, vector<16x128xbf16>, vector<16x128xbf16>, vector<16x128xbf16>, vector<16x128xbf16>, vector<16x128xbf16>, vector<16x128xbf16>, vector<16x128xbf16>, vector<16x128xbf16>, vector<16x128xbf16>, vector<16x128xbf16> -> vector<256x128xbf16>
    %81 = tpu.concatenate %67, %68, %71, %72, %73, %74, %75, %76, %77, %78, %79 in 0 : vector<16x128xbf16>, vector<16x128xbf16>, vector<16x128xbf16>, vector<16x128xbf16>, vector<16x128xbf16>, vector<16x128xbf16>, vector<16x128xbf16>, vector<16x128xbf16>, vector<16x128xbf16>, vector<16x128xbf16>, vector<16x128xbf16> -> vector<176x128xbf16>
    %82 = tpu.concatenate %80, %81 in 0 : vector<256x128xbf16>, vector<176x128xbf16> -> vector<432x128xbf16>
    %cst_27 = arith.constant dense<0.000000e+00> : vector<1x128xf32>
    %83 = tpu.matmul %0, %82, %cst_27 {dimension_numbers = #tpu.dot_dimension_numbers<[1], [0], [0], [1], [0, 0, 1, 1], [], []>} : vector<1x432xbf16>, vector<432x128xbf16>, vector<1x128xf32> -> vector<1x128xf32>
    %84 = vector.broadcast %1 : f32 to vector<1x128xf32>
    %85 = arith.addf %83, %84 : vector<1x128xf32>
    %cst_28 = arith.constant 0.000000e+00 : f32
    %86 = vector.broadcast %cst_28 : f32 to vector<1x128xf32>
    %87 = arith.subf %86, %85 : vector<1x128xf32>
    %88 = math.exp %87 : vector<1x128xf32>
    %cst_29 = arith.constant 1.000000e+00 : f32
    %89 = vector.broadcast %cst_29 : f32 to vector<1x128xf32>
    %90 = arith.addf %89, %88 : vector<1x128xf32>
    %91 = tpu.reciprocal %90 {approx = true} : vector<1x128xf32> -> vector<1x128xf32>
    %92 = tpu.concatenate %46, %91 in 0 : vector<1x128xf32>, vector<1x128xf32> -> vector<2x128xf32>
    %c0_30 = arith.constant 0 : index
    %c0_31 = arith.constant 0 : index
    %c0_32 = arith.constant 0 : index
    %93 = vector.load %arg6[%c0_30, %c0_31, %c0_32] : memref<1x2x128xf32, #tpu.memory_space<vmem>>, vector<1x2x128xf32>
    %94 = vector.shape_cast %93 : vector<1x2x128xf32> to vector<2x128xf32>
    %95 = vector.shape_cast %92 : vector<2x128xf32> to vector<1x2x128xf32>
    tpu.vector_store %arg6[%c0_30, %c0_31, %c0_32], %95 {strides = array<i32>} : memref<1x2x128xf32, #tpu.memory_space<vmem>>, vector<1x2x128xf32>,
    return
  }
  func.func @transform_0(%arg0: i32, %arg1: i32) -> (i32, i32) {
    %c0_i32 = arith.constant 0 : i32
    %c0_i32_0 = arith.constant 0 : i32
    %c0_i32_1 = arith.constant 0 : i32
    return %c0_i32, %c0_i32_0 : i32, i32
  }
  func.func @transform_1(%arg0: i32, %arg1: i32) -> i32 {
    %c0_i32 = arith.constant 0 : i32
    %c0_i32_0 = arith.constant 0 : i32
    return %c0_i32 : i32
  }
  func.func @transform_2(%arg0: i32, %arg1: i32) -> (i32, i32, i32, i32) {
    %c0_i32 = arith.constant 0 : i32
    %c0_i32_0 = arith.constant 0 : i32
    %c0_i32_1 = arith.constant 0 : i32
    return %arg0, %arg1, %c0_i32, %c0_i32_0 : i32, i32, i32, i32
  }
  func.func @transform_3(%arg0: i32, %arg1: i32) -> (i32, i32, i32, i32) {
    %c1_i32 = arith.constant 1 : i32
    %0 = arith.addi %arg1, %c1_i32 : i32
    %c1_i32_0 = arith.constant 1 : i32
    %1 = arith.muli %0, %c1_i32_0 : i32
    %c0_i32 = arith.constant 0 : i32
    %c0_i32_1 = arith.constant 0 : i32
    %c0_i32_2 = arith.constant 0 : i32
    return %arg0, %1, %c0_i32, %c0_i32_1 : i32, i32, i32, i32
  }
  func.func @transform_4(%arg0: i32, %arg1: i32) -> (i32, i32, i32) {
    %c0_i32 = arith.constant 0 : i32
    %c0_i32_0 = arith.constant 0 : i32
    return %arg0, %arg1, %c0_i32 : i32, i32, i32
  }
}

</mosaic_0001>

<llo_original>
// kernel: aoc_top_forward.1
$region0: #{aoc_top_forward.1}
  #allocation0 [shape = 'u32[]', space=smem, size = 0x4, offset = 0x4, fixed_abs, tag = 'smem constant byte address 0x4 - core index']
  #allocation1 [shape = 'u32[144,128]{1,0:T(1,128)}', space=vmem, size = 0x12000, scoped, tag = 'internal scratch']
  #allocation2 [shape = 'f32[1]{0:T(128)S(6)}', space=smem, size = 0x200, scoped, tag = 'scoped memory for aoc_top_forward.1']
  %s0 = inlined_call_operand.vmem [shape: bf16[1,432], index: 0, kind: input, shape index: {}]
  %s1 = inlined_call_operand.<no memory space> [shape: f32[1], index: 1, kind: input, shape index: {}]
  %s2 = inlined_call_operand.vmem [shape: bf16[2,4,16,256], index: 2, kind: input, shape index: {}, may-alias: {2,3}]
  %s3 = inlined_call_operand.vmem [shape: bf16[2,4,16,256], index: 3, kind: input, shape index: {}, may-alias: {2,3}]
  %s4 = inlined_call_operand.vmem [shape: f32[2,2,128], index: 4, kind: output, shape index: {}]
  %s5 = sld [smem:[#allocation0]]
  $region49: #{aoc_top_forward.1} parent=0
    _
  %s7 = ssub.s32 1, %s5
  %s8 = scalar_select 0, %s7, %s5
  %9 = sst [smem:[#allocation2]] %s1
  loop: start=0, step=1, limit=4
  $region2: #{aoc_top_forward.1} parent=0 // loop_pre_header
    _
  $region3: #{aoc_top_forward.1} parent=0 // loop_header
    %s11 = sphi 0, %s15
    %p12 = scmp.ge.s32.totalorder %s11, 4
    %s18 = sphi 0, %s30
    %s19 = sphi 0, %s26
    %s20 = sphi 0, %s18
    %s21 = sphi 0, %s19
    %s22 = sphi 0, %s20
    %s23 = sphi 0, %s21
    %s31 = sphi 0, %s31
    %s33 = sphi 0, %s31
    %s34 = sphi 0, %s33
    %s48 = sphi 0, %s34
    %s52 = sphi 0, %s52
    %s54 = sphi 0, %s52
    %s55 = sphi 0, %s54
    %s69 = sphi 0, %s55
    %s77 = sphi 0, %s79
    %s80 = sphi 0, %s77
    %s81 = sphi 0, %s80
    %s97 = sphi 0, %s81
    %s107 = sphi 0, %s109
    %s110 = sphi 0, %s107
    %s111 = sphi 0, %s110
    %s127 = sphi 0, %s111
    %s135 = sphi 0, %s137
    %s138 = sphi 0, %s135
    %s139 = sphi 0, %s138
    %s155 = sphi 0, %s139
  $region4: #{aoc_top_forward.1} parent=0 // loop_header_branch
    %14 = sbr.rel (%p12) target = $region8
  $region5: #{aoc_top_forward.1} parent=0 // loop_body
    %s16 = ssub.s32 %s11, 1
    %s17 = ssub.s32 %s11, 2
    %s24 = sadd.s32 1, %s19
    %p25 = scmp.ge.s32.totalorder %s24, 1
    %s26 = scalar_select %p25, 0, %s24
    %s27 = sadd.s32 1, %s18
    %s28 = scalar_select %p25, %s27, %s18
    %p29 = scmp.ge.s32.totalorder %s28, 2
    %s30 = scalar_select %p29, 0, %s28
    %s32 = sadd.s32 %s31, 1
    %p35 = scmp.eq.s32.totalorder %s11, 1
    %p36 = scmp.ne.s32.totalorder %s31, %s33
    %p37 = scmp.eq.s32.totalorder %s11, 0
    %p38 = por %p36, %p37
    %p39 = scmp.ne.s32.totalorder %s31, %s33
    %p40 = scmp.eq.s32.totalorder %s16, 1
    %p41 = por %p39, %p40
    %p42 = scmp.ne.s32.totalorder %s33, %s34
    %p43 = scmp.eq.s32.totalorder %s16, 0
    %p44 = por %p42, %p43
    %p45 = scmp.ne.s32.totalorder %s33, %s34
    %p46 = scmp.eq.s32.totalorder %s17, 1
    %p47 = por %p45, %p46
    %p49 = scmp.ne.s32.totalorder %s34, %s48
    %p50 = scmp.eq.s32.totalorder %s17, 0
    %p51 = por %p49, %p50
    %s53 = sadd.s32 %s52, 1
    %p56 = scmp.eq.s32.totalorder %s11, 1
    %p57 = scmp.ne.s32.totalorder %s52, %s54
    %p58 = scmp.eq.s32.totalorder %s11, 0
    %p59 = por %p57, %p58
    %p60 = scmp.ne.s32.totalorder %s52, %s54
    %p61 = scmp.eq.s32.totalorder %s16, 1
    %p62 = por %p60, %p61
    %p63 = scmp.ne.s32.totalorder %s54, %s55
    %p64 = scmp.eq.s32.totalorder %s16, 0
    %p65 = por %p63, %p64
    %p66 = scmp.ne.s32.totalorder %s54, %s55
    %p67 = scmp.eq.s32.totalorder %s17, 1
    %p68 = por %p66, %p67
    %p70 = scmp.ne.s32.totalorder %s55, %s69
    %p71 = scmp.eq.s32.totalorder %s17, 0
    %p72 = por %p70, %p71
    %s73 = ssub.s32 %s18, %s30
    %s74 = ssub.s32 %s19, %s26
    %s75 = sor.u32 %s73, %s74
    %p76 = scmp.eq.s32.totalorder %s75, 0
    %s78 = sadd.s32 %s77, 1
    %s79 = scalar_select %p76, %s77, %s78
    %p82 = pneg %p76
    %p83 = scmp.eq.s32.totalorder %s11, 1
    %p84 = por %p82, %p83
    %p85 = scmp.ne.s32.totalorder %s77, %s80
    %p86 = scmp.eq.s32.totalorder %s11, 0
    %p87 = por %p85, %p86
    %p88 = scmp.ne.s32.totalorder %s77, %s80
    %p89 = scmp.eq.s32.totalorder %s16, 1
    %p90 = por %p88, %p89
    %p91 = scmp.ne.s32.totalorder %s80, %s81
    %p92 = scmp.eq.s32.totalorder %s16, 0
    %p93 = por %p91, %p92
    %p94 = scmp.ne.s32.totalorder %s80, %s81
    %p95 = scmp.eq.s32.totalorder %s17, 1
    %p96 = por %p94, %p95
    %p98 = scmp.ne.s32.totalorder %s81, %s97
    %p99 = scmp.eq.s32.totalorder %s17, 0
    %p100 = por %p98, %p99
    %s101 = sadd.s32 %s19, 1
    %s102 = sadd.s32 %s26, 1
    %s103 = ssub.s32 %s18, %s30
    %s104 = ssub.s32 %s101, %s102
    %s105 = sor.u32 %s103, %s104
    %p106 = scmp.eq.s32.totalorder %s105, 0
    %s108 = sadd.s32 %s107, 1
    %s109 = scalar_select %p106, %s107, %s108
    %p112 = pneg %p106
    %p113 = scmp.eq.s32.totalorder %s11, 1
    %p114 = por %p112, %p113
    %p115 = scmp.ne.s32.totalorder %s107, %s110
    %p116 = scmp.eq.s32.totalorder %s11, 0
    %p117 = por %p115, %p116
    %p118 = scmp.ne.s32.totalorder %s107, %s110
    %p119 = scmp.eq.s32.totalorder %s16, 1
    %p120 = por %p118, %p119
    %p121 = scmp.ne.s32.totalorder %s110, %s111
    %p122 = scmp.eq.s32.totalorder %s16, 0
    %p123 = por %p121, %p122
    %p124 = scmp.ne.s32.totalorder %s110, %s111
    %p125 = scmp.eq.s32.totalorder %s17, 1
    %p126 = por %p124, %p125
    %p128 = scmp.ne.s32.totalorder %s111, %s127
    %p129 = scmp.eq.s32.totalorder %s17, 0
    %p130 = por %p128, %p129
    %s131 = ssub.s32 %s18, %s30
    %s132 = ssub.s32 %s19, %s26
    %s133 = sor.u32 %s131, %s132
    %p134 = scmp.eq.s32.totalorder %s133, 0
    %s136 = sadd.s32 %s135, 1
    %s137 = scalar_select %p134, %s135, %s136
    %p140 = pneg %p134
    %p141 = scmp.eq.s32.totalorder %s11, 1
    %p142 = por %p140, %p141
    %p143 = scmp.ne.s32.totalorder %s135, %s138
    %p144 = scmp.eq.s32.totalorder %s11, 0
    %p145 = por %p143, %p144
    %p146 = scmp.ne.s32.totalorder %s135, %s138
    %p147 = scmp.eq.s32.totalorder %s16, 1
    %p148 = por %p146, %p147
    %p149 = scmp.ne.s32.totalorder %s138, %s139
    %p150 = scmp.eq.s32.totalorder %s16, 0
    %p151 = por %p149, %p150
    %p152 = scmp.ne.s32.totalorder %s138, %s139
    %p153 = scmp.eq.s32.totalorder %s17, 1
    %p154 = por %p152, %p153
    %p156 = scmp.ne.s32.totalorder %s139, %s155
    %p157 = scmp.eq.s32.totalorder %s17, 0
    %p158 = por %p156, %p157
    %p159 = scmp.le.s32.totalorder 1, %s11
    %p160 = scmp.lt.s32.totalorder %s11, 3
    %p161 = pnand %p159, %p160
    %p162 = pneg %p161
    // Predicated region
    $region9: #{aoc_top_forward.1} parent=5 // pred_check
      _
    $region10: #{aoc_top_forward.1} parent=5 // pred_check_branch
      %164 = sbr.rel (%p161) target = $region12
    $region11: #{aoc_top_forward.1} parent=5 // pred_region
      %s165 = ssub.s32 %s11, 1
      // Predicated region
      $region13: #{aoc_top_forward.1} parent=11 // pred_check
        %p166 = pneg %p44
      $region14: #{aoc_top_forward.1} parent=11 // pred_check_branch
        %168 = sbr.rel (%p166) target = $region16
      $region15: #{aoc_top_forward.1} parent=11 // pred_region
        _
      $region16: #{aoc_top_forward.1} parent=11 // pred_fallthru
        _
      // Predicated region
      $region17: #{aoc_top_forward.1} parent=11 // pred_check
        %p169 = pneg %p65
      $region18: #{aoc_top_forward.1} parent=11 // pred_check_branch
        %171 = sbr.rel (%p169) target = $region20
      $region19: #{aoc_top_forward.1} parent=11 // pred_region
        _
      $region20: #{aoc_top_forward.1} parent=11 // pred_fallthru
        _
    $region12: #{aoc_top_forward.1} parent=5 // pred_fallthru
      _
    %p172 = scmp.lt.s32.totalorder %s11, 2
    // Predicated region
    $region21: #{aoc_top_forward.1} parent=5 // pred_check
      %p173 = pneg %p172
    $region22: #{aoc_top_forward.1} parent=5 // pred_check_branch
      %175 = sbr.rel (%p173) target = $region24
    $region23: #{aoc_top_forward.1} parent=5 // pred_region
      // Predicated region
      $region25: #{aoc_top_forward.1} parent=23 // pred_check
        %p176 = pneg %p87
      $region26: #{aoc_top_forward.1} parent=23 // pred_check_branch
        %178 = sbr.rel (%p176) target = $region28
      $region27: #{aoc_top_forward.1} parent=23 // pred_region
        %s179 = smul.u32 2, %s19
        %p180 = scmp.lt.s32.totalorder %s18, 1
        %s181 = scalar_select %p180, %s18, 1
        %p182 = scmp.lt.s32.totalorder %s179, 3
        %s183 = scalar_select %p182, %s179, 3
        %s184 = smul.addr %s183, 4
        %s185 = smul.addr %s181, 16
        %s186 = sadd.s32 %s184, %s185
        %s187 = smul.addr %s186, 4
        %s188 = scalar_lea.vmem %s2, %s187
        %s189 = smul.u32 2, %s19
      $region28: #{aoc_top_forward.1} parent=23 // pred_fallthru
        _
      // Predicated region
      $region29: #{aoc_top_forward.1} parent=23 // pred_check
        %p190 = pneg %p117
      $region30: #{aoc_top_forward.1} parent=23 // pred_check_branch
        %192 = sbr.rel (%p190) target = $region32
      $region31: #{aoc_top_forward.1} parent=23 // pred_region
        %s193 = sadd.s32 %s19, 1
        %s194 = smul.u32 2, %s193
        %p195 = scmp.lt.s32.totalorder %s18, 1
        %s196 = scalar_select %p195, %s18, 1
        %p197 = scmp.lt.s32.totalorder %s194, 3
        %s198 = scalar_select %p197, %s194, 3
        %s199 = smul.addr %s198, 4
        %s200 = smul.addr %s196, 16
        %s201 = sadd.s32 %s199, %s200
        %s202 = smul.addr %s201, 4
        %s203 = scalar_lea.vmem %s3, %s202
        %s204 = sadd.s32 %s19, 1
        %s205 = smul.u32 2, %s204
      $region32: #{aoc_top_forward.1} parent=23 // pred_fallthru
        _
    $region24: #{aoc_top_forward.1} parent=5 // pred_fallthru
      _
    %p206 = scmp.le.s32.totalorder 1, %s11
    %p207 = scmp.lt.s32.totalorder %s11, 3
    %p208 = pnand %p206, %p207
    %p209 = pneg %p208
    // Predicated region
    $region33: #{aoc_top_forward.1} parent=5 // pred_check
      _
    $region34: #{aoc_top_forward.1} parent=5 // pred_check_branch
      %211 = sbr.rel (%p208) target = $region36
    $region35: #{aoc_top_forward.1} parent=5 // pred_region
      %s212 = ssub.s32 %s11, 1
      %p213 = pneg %p44
      %p214 = pneg %p41
      %p215 = pneg %p65
      %p216 = pneg %p62
      %s217 = smul.u32 2, %s21
      %p218 = scmp.lt.s32.totalorder %s20, 1
      %s219 = scalar_select %p218, %s20, 1
      %p220 = scmp.lt.s32.totalorder %s217, 3
      %s221 = scalar_select %p220, %s217, 3
      %s222 = smul.addr %s221, 4
      %s223 = smul.addr %s219, 16
      %s224 = sadd.s32 %s222, %s223
      %s225 = smul.addr %s224, 4
      %s226 = scalar_lea.vmem %s2, %s225
      %p227 = pneg %p93
      %p228 = pneg %p90
      %s229 = sadd.s32 %s21, 1
      %s230 = smul.u32 2, %s229
      %p231 = scmp.lt.s32.totalorder %s20, 1
      %s232 = scalar_select %p231, %s20, 1
      %p233 = scmp.lt.s32.totalorder %s230, 3
      %s234 = scalar_select %p233, %s230, 3
      %s235 = smul.addr %s234, 4
      %s236 = smul.addr %s232, 16
      %s237 = sadd.s32 %s235, %s236
      %s238 = smul.addr %s237, 4
      %s239 = scalar_lea.vmem %s3, %s238
      %p240 = pneg %p123
      %p241 = pneg %p120
      %p242 = pneg %p151
      %p243 = pneg %p148
      %p244 = scmp.lt.s32.totalorder %s20, 1
      %s245 = scalar_select %p244, %s20, 1
      %p246 = scmp.lt.s32.totalorder %s21, 0
      %s247 = scalar_select %p246, %s21, 0
      %s248 = sadd.s32 %s247, %s245
      %s249 = smul.addr %s248, 2
      %s250 = scalar_lea.vmem %s4, %s249
      %s251 = smul.u32 2, %s21
      %p252 = scmp.lt.s32.totalorder %s20, 1
      %s253 = scalar_select %p252, %s20, 1
      %p254 = scmp.lt.s32.totalorder %s251, 3
      %s255 = scalar_select %p254, %s251, 3
      %s256 = smul.addr %s255, 4
      %s257 = smul.addr %s253, 16
      %s258 = sadd.s32 %s256, %s257
      %s259 = smul.addr %s258, 4
      %s260 = scalar_lea.vmem %s2, %s259
      %s261 = smul.u32 2, %s21
      %s262 = sadd.s32 %s21, 1
      %s263 = smul.u32 2, %s262
      %p264 = scmp.lt.s32.totalorder %s20, 1
      %s265 = scalar_select %p264, %s20, 1
      %p266 = scmp.lt.s32.totalorder %s263, 3
      %s267 = scalar_select %p266, %s263, 3
      %s268 = smul.addr %s267, 4
      %s269 = smul.addr %s265, 16
      %s270 = sadd.s32 %s268, %s269
      %s271 = smul.addr %s270, 4
      %s272 = scalar_lea.vmem %s3, %s271
      %s273 = sadd.s32 %s21, 1
      %s274 = smul.u32 2, %s273
      %p275 = scmp.lt.s32.totalorder %s20, 1
      %s276 = scalar_select %p275, %s20, 1
      %p277 = scmp.lt.s32.totalorder %s21, 0
      %s278 = scalar_select %p277, %s21, 0
      %s279 = sadd.s32 %s278, %s276
      %s280 = smul.addr %s279, 2
      %s281 = scalar_lea.vmem %s4, %s280
      %v283 = vld [vmem:[%s0] sm:$0xf]
      %s284 = sld [smem:[#allocation2]]
      %v285 = vld [vmem:[%s260] sm:$0xff]
      %v286 = vld [vmem:[%s260 + $0x8] sm:$0xff]
      %s287 = scalar_lea.vmem %s260, 16
      %v288 = vld [vmem:[%s287] sm:$0xff]
      %v289 = vld [vmem:[%s287 + $0x8] sm:$0xff]
      %v290 = vld [vmem:[%s272] sm:$0xff]
      %v291 = vld [vmem:[%s272 + $0x8] sm:$0xff]
      %v294 = vunpack.c.l.b16 %v285
      %v295 = vunpack.c.l.b16 %v286
      %v296 = vpack.c.b16 %v295, %v294
      %v298 = vunpack.c.h.b16 %v285
      %v299 = vunpack.c.h.b16 %v286
      %v300 = vpack.c.b16 %v299, %v298
      %301 = vrot.lane.b32.xlu0 %v296, 127
      %v302 = vpop.permute.xlu0 %301
      %303 = vrot.lane.b32.xlu0 %v300, 127
      %v304 = vpop.permute.xlu0 %303
      %vm305 = vcmask 1039360
      %v306 = vsel %vm305, %v302, %v304
      %308 = vrot.lane.b32.xlu0 %v296, 126
      %v309 = vpop.permute.xlu0 %308
      %310 = vrot.lane.b32.xlu0 %v300, 126
      %v311 = vpop.permute.xlu0 %310
      %vm312 = vcmask 1031168
      %v313 = vsel %vm312, %v309, %v311
      %315 = vrot.lane.b32.xlu0 %v296, 118
      %v316 = vpop.permute.xlu0 %315
      %317 = vrot.lane.b32.xlu0 %v300, 118
      %v318 = vpop.permute.xlu0 %317
      %vm319 = vcmask 965632
      %v320 = vsel %vm319, %v316, %v318
      %322 = vrot.lane.b32.xlu0 %v296, 117
      %v323 = vpop.permute.xlu0 %322
      %324 = vrot.lane.b32.xlu0 %v300, 117
      %v325 = vpop.permute.xlu0 %324
      %vm326 = vcmask 957440
      %v327 = vsel %vm326, %v323, %v325
      %329 = vrot.lane.b32.xlu0 %v296, 116
      %v330 = vpop.permute.xlu0 %329
      %331 = vrot.lane.b32.xlu0 %v300, 116
      %v332 = vpop.permute.xlu0 %331
      %vm333 = vcmask 949248
      %v334 = vsel %vm333, %v330, %v332
      %336 = vrot.lane.b32.xlu0 %v296, 108
      %v337 = vpop.permute.xlu0 %336
      %338 = vrot.lane.b32.xlu0 %v300, 108
      %v339 = vpop.permute.xlu0 %338
      %vm340 = vcmask 883712
      %v341 = vsel %vm340, %v337, %v339
      %343 = vrot.lane.b32.xlu0 %v296, 107
      %v344 = vpop.permute.xlu0 %343
      %345 = vrot.lane.b32.xlu0 %v300, 107
      %v346 = vpop.permute.xlu0 %345
      %vm347 = vcmask 875520
      %v348 = vsel %vm347, %v344, %v346
      %350 = vrot.lane.b32.xlu0 %v296, 106
      %v351 = vpop.permute.xlu0 %350
      %352 = vrot.lane.b32.xlu0 %v300, 106
      %v353 = vpop.permute.xlu0 %352
      %vm354 = vcmask 867328
      %v355 = vsel %vm354, %v351, %v353
      %v359 = vunpack.c.l.b16 %v288
      %v360 = vunpack.c.l.b16 %v289
      %v361 = vpack.c.b16 %v360, %v359
      %v363 = vunpack.c.h.b16 %v288
      %v364 = vunpack.c.h.b16 %v289
      %v365 = vpack.c.b16 %v364, %v363
      %366 = vrot.lane.b32.xlu0 %v361, 127
      %v367 = vpop.permute.xlu0 %366
      %368 = vrot.lane.b32.xlu0 %v365, 127
      %v369 = vpop.permute.xlu0 %368
      %v370 = vsel %vm305, %v367, %v369
      %372 = vrot.lane.b32.xlu0 %v361, 126
      %v373 = vpop.permute.xlu0 %372
      %374 = vrot.lane.b32.xlu0 %v365, 126
      %v375 = vpop.permute.xlu0 %374
      %v376 = vsel %vm312, %v373, %v375
      %378 = vrot.lane.b32.xlu0 %v361, 118
      %v379 = vpop.permute.xlu0 %378
      %380 = vrot.lane.b32.xlu0 %v365, 118
      %v381 = vpop.permute.xlu0 %380
      %v382 = vsel %vm319, %v379, %v381
      %384 = vrot.lane.b32.xlu0 %v361, 117
      %v385 = vpop.permute.xlu0 %384
      %386 = vrot.lane.b32.xlu0 %v365, 117
      %v387 = vpop.permute.xlu0 %386
      %v388 = vsel %vm326, %v385, %v387
      %390 = vrot.lane.b32.xlu0 %v361, 116
      %v391 = vpop.permute.xlu0 %390
      %392 = vrot.lane.b32.xlu0 %v365, 116
      %v393 = vpop.permute.xlu0 %392
      %v394 = vsel %vm333, %v391, %v393
      %396 = vrot.lane.b32.xlu0 %v361, 108
      %v397 = vpop.permute.xlu0 %396
      %398 = vrot.lane.b32.xlu0 %v365, 108
      %v399 = vpop.permute.xlu0 %398
      %v400 = vsel %vm340, %v397, %v399
      %v404 = vunpack.c.l.b16 %v290
      %v405 = vunpack.c.l.b16 %v291
      %v406 = vpack.c.b16 %v405, %v404
      %407 = vrot.lane.b32.xlu0 %v406, 21
      %v408 = vpop.permute.xlu0 %407
      %v409 = vunpack.c.h.b16 %v290
      %v410 = vunpack.c.h.b16 %v291
      %v411 = vpack.c.b16 %v410, %v409
      %412 = vrot.lane.b32.xlu0 %v406, 20
      %v413 = vpop.permute.xlu0 %412
      %414 = vrot.lane.b32.xlu0 %v411, 20
      %v415 = vpop.permute.xlu0 %414
      %vm416 = vcmask 162816
      %v417 = vsel %vm416, %v413, %v415
      %418 = vrot.lane.b32.xlu0 %v406, 19
      %v419 = vpop.permute.xlu0 %418
      %420 = vrot.lane.b32.xlu0 %v411, 19
      %v421 = vpop.permute.xlu0 %420
      %vm422 = vcmask 154624
      %v423 = vsel %vm422, %v419, %v421
      %424 = vrot.lane.b32.xlu0 %v406, 11
      %v425 = vpop.permute.xlu0 %424
      %426 = vrot.lane.b32.xlu0 %v411, 11
      %v427 = vpop.permute.xlu0 %426
      %vm428 = vcmask 89088
      %v429 = vsel %vm428, %v425, %v427
      %430 = vrot.lane.b32.xlu0 %v406, 10
      %v431 = vpop.permute.xlu0 %430
      %432 = vrot.lane.b32.xlu0 %v411, 10
      %v433 = vpop.permute.xlu0 %432
      %vm434 = vcmask 80896
      %v435 = vsel %vm434, %v431, %v433
      %436 = vrot.lane.b32.xlu0 %v406, 9
      %v437 = vpop.permute.xlu0 %436
      %438 = vrot.lane.b32.xlu0 %v411, 9
      %v439 = vpop.permute.xlu0 %438
      %vm440 = vcmask 72704
      %v441 = vsel %vm440, %v437, %v439
      %442 = vrot.lane.b32.xlu0 %v406, 1
      %v443 = vpop.permute.xlu0 %442
      %444 = vrot.lane.b32.xlu0 %v411, 1
      %v445 = vpop.permute.xlu0 %444
      %vm446 = vcmask 7168
      %v447 = vsel %vm446, %v443, %v445
      %448 = vrot.lane.b32.xlu0 %v406, 127
      %v449 = vpop.permute.xlu0 %448
      %450 = vrot.lane.b32.xlu0 %v411, 127
      %v451 = vpop.permute.xlu0 %450
      %v452 = vsel %vm305, %v449, %v451
      %453 = vrot.lane.b32.xlu0 %v361, 107
      %v454 = vpop.permute.xlu0 %453
      %455 = vrot.lane.b32.xlu0 %v365, 107
      %v456 = vpop.permute.xlu0 %455
      %457 = vrot.lane.b32.xlu0 %v370, 107
      %v458 = vpop.permute.xlu0 %457
      %459 = vrot.lane.b32.xlu0 %v369, 107
      %v460 = vpop.permute.xlu0 %459
      %461 = vrot.lane.b32.xlu0 %v408, 107
      %v462 = vpop.permute.xlu0 %461
      %463 = vrot.lane.b32.xlu0 %v413, 107
      %v464 = vpop.permute.xlu0 %463
      %465 = vrot.lane.b32.xlu0 %v417, 107
      %v466 = vpop.permute.xlu0 %465
      %467 = vrot.lane.b32.xlu0 %v419, 107
      %v468 = vpop.permute.xlu0 %467
      %469 = vrot.lane.b32.xlu0 %v423, 107
      %v470 = vpop.permute.xlu0 %469
      %471 = vrot.lane.b32.xlu0 %v425, 107
      %v472 = vpop.permute.xlu0 %471
      %473 = vrot.lane.b32.xlu0 %v429, 107
      %v474 = vpop.permute.xlu0 %473
      %475 = vrot.lane.b32.xlu0 %v431, 107
      %v476 = vpop.permute.xlu0 %475
      %477 = vrot.lane.b32.xlu0 %v435, 107
      %v478 = vpop.permute.xlu0 %477
      %479 = vrot.lane.b32.xlu0 %v437, 107
      %v480 = vpop.permute.xlu0 %479
      %481 = vrot.lane.b32.xlu0 %v441, 107
      %v482 = vpop.permute.xlu0 %481
      %483 = vrot.lane.b32.xlu0 %v443, 107
      %v484 = vpop.permute.xlu0 %483
      %485 = vrot.lane.b32.xlu0 %v447, 107
      %v486 = vpop.permute.xlu0 %485
      %487 = vrot.lane.b32.xlu0 %v406, 107
      %v488 = vpop.permute.xlu0 %487
      %489 = vrot.lane.b32.xlu0 %v411, 107
      %v490 = vpop.permute.xlu0 %489
      %491 = vrot.lane.b32.xlu0 %v452, 107
      %v492 = vpop.permute.xlu0 %491
      %493 = vrot.lane.b32.xlu0 %v451, 107
      %v494 = vpop.permute.xlu0 %493
      %v495 = vsel %vm347, %v454, %v456
      %v496 = vsel %vm347, %v458, %v460
      %v497 = vsel %vm347, %v464, %v466
      %v498 = vsel %vm347, %v468, %v470
      %v499 = vsel %vm347, %v472, %v474
      %v500 = vsel %vm347, %v476, %v478
      %v501 = vsel %vm347, %v480, %v482
      %v502 = vsel %vm347, %v484, %v486
      %v503 = vsel %vm347, %v488, %v490
      %v504 = vsel %vm347, %v492, %v494
      %v516 = vstv %s284
      %v519 = vunpack.c.l.s4 1966171168
      %v520 = vunpack.c.0.s8 %v519
      %v521 = vlaneseq
      %v522 = vshrl.u32 %v521, 7
      %v523 = vsub.s32 %v520, %v522
      %v524 = vrot.slane %v283, %v523
      %v525 = vcombine.high %v524, %v524
      %v527 = vunpack.c.l.s4 1966171168
      %v528 = vunpack.c.0.s8 %v527
      %v529 = vlaneseq
      %v530 = vshrl.u32 %v529, 7
      %v531 = vsub.s32 %v528, %v530
      %v532 = vrot.slane %v524, %v531
      %v534 = vunpack.c.l.s4 1966171168
      %v535 = vunpack.c.0.s8 %v534
      %v536 = vlaneseq
      %v537 = vshrl.u32 %v536, 7
      %v538 = vsub.s32 %v535, %v537
      %v539 = vrot.slane %v525, %v538
      %v540 = vcombine.high %v532, %v532
      %v541 = vcombine.high %v539, %v539
      %vm545 = vcmask 392192
      %v547 = vsel %vm545, %v541, 0
      %549 = vmatprep.subr.bf16.mxu0 0
      %550 = vmatpush1.bf16.msra.mxu0 %v296
      %551 = vmatprep.subr.bf16.mxu0 0
      %552 = vmatpush1.bf16.msra.mxu0 %v306
      %553 = vmatprep.subr.bf16.mxu0 0
      %554 = vmatpush1.bf16.msra.mxu0 %v313
      %555 = vmatprep.subr.bf16.mxu0 0
      %556 = vmatpush1.bf16.msra.mxu0 %v320
      %557 = vmatprep.subr.bf16.mxu0 0
      %558 = vmatpush1.bf16.msra.mxu0 %v327
      %559 = vmatprep.subr.bf16.mxu0 0
      %560 = vmatpush1.bf16.msra.mxu0 %v334
      %561 = vmatprep.subr.bf16.mxu0 0
      %562 = vmatpush1.bf16.msra.mxu0 %v341
      %563 = vmatprep.subr.bf16.mxu0 0
      %564 = vmatpush1.bf16.msra.mxu0 %v348
      %565 = vmatprep.subr.bf16.mxu0 0
      %566 = vmatpush1.bf16.msra.mxu0 %v355
      %567 = vmatprep.subr.bf16.mxu0 0
      %568 = vmatpush1.bf16.msra.mxu0 %v361
      %569 = vmatprep.subr.bf16.mxu0 0
      %570 = vmatpush1.bf16.msra.mxu0 %v370
      %571 = vmatprep.subr.bf16.mxu0 0
      %572 = vmatpush1.bf16.msra.mxu0 %v376
      %573 = vmatprep.subr.bf16.mxu0 0
      %574 = vmatpush1.bf16.msra.mxu0 %v382
      %575 = vmatprep.subr.bf16.mxu0 0
      %576 = vmatpush1.bf16.msra.mxu0 %v388
      %577 = vmatprep.subr.bf16.mxu0 0
      %578 = vmatpush1.bf16.msra.mxu0 %v394
      %579 = vmatprep.subr.bf16.mxu0 0
      %580 = vmatpush1.bf16.msra.mxu0 %v400
      %581 = vmatprep.mubr.bf16.mxu0 %v539
      %582 = vmatmul.mubr.bf16.gmra.mrb[0].mxu0 %v532
      %v583 = vpop.f32.mrb[0].mxu0
      %v584 = vadd.f32 %v516, %v583
      %v585 = vpop.f32.mrb[0].mxu0
      %v586 = vpop.f32.mrb[0].mxu0
      %v587 = vpop.f32.mrb[0].mxu0
      %588 = vdwg.mxu0
      %589 = vmatprep.subr.bf16.mxu0 0
      %590 = vmatpush1.bf16.msra.mxu0 %v495
      %591 = vmatprep.subr.bf16.mxu0 0
      %592 = vmatpush1.bf16.msra.mxu0 %v496
      %593 = vmatprep.subr.bf16.mxu0 0
      %594 = vmatpush1.bf16.msra.mxu0 %v462
      %595 = vmatprep.subr.bf16.mxu0 0
      %596 = vmatpush1.bf16.msra.mxu0 %v497
      %597 = vmatprep.subr.bf16.mxu0 0
      %598 = vmatpush1.bf16.msra.mxu0 %v498
      %599 = vmatprep.subr.bf16.mxu0 0
      %600 = vmatpush1.bf16.msra.mxu0 %v499
      %601 = vmatprep.subr.bf16.mxu0 0
      %602 = vmatpush1.bf16.msra.mxu0 %v500
      %603 = vmatprep.subr.bf16.mxu0 0
      %604 = vmatpush1.bf16.msra.mxu0 %v501
      %605 = vmatprep.subr.bf16.mxu0 0
      %606 = vmatpush1.bf16.msra.mxu0 %v502
      %607 = vmatprep.subr.bf16.mxu0 0
      %608 = vmatpush1.bf16.msra.mxu0 %v503
      %609 = vmatprep.subr.bf16.mxu0 0
      %610 = vmatpush1.bf16.msra.mxu0 %v504
      %611 = vmatprep.subr.bf16.mxu0 0
      %612 = vmatpush1.bf16.msra.mxu0 0
      %613 = vmatprep.subr.bf16.mxu0 0
      %614 = vmatpush1.bf16.msra.mxu0 0
      %615 = vmatprep.subr.bf16.mxu0 0
      %616 = vmatpush1.bf16.msra.mxu0 0
      %617 = vmatprep.subr.bf16.mxu0 0
      %618 = vmatpush1.bf16.msra.mxu0 0
      %619 = vmatprep.subr.bf16.mxu0 0
      %620 = vmatpush1.bf16.msra.mxu0 0
      %621 = vmatprep.mubr.bf16.mxu0 %v547
      %622 = vmatmul.mubr.bf16.gmra.mrb[0].mxu0 %v540
      %v623 = vpop.f32.mrb[0].mxu0
      %v624 = vadd.f32 %v584, %v623
      %v625 = vpop.f32.mrb[0].mxu0
      %v626 = vpop.f32.mrb[0].mxu0
      %v627 = vpop.f32.mrb[0].mxu0
      %628 = vdwg.mxu0
      %v629 = vsub.f32 0.0, %v624
      %v630 = vmul.f32 %v629, 1.442695
      %v631 = vpow.pop %v630
      %v632 = vadd.f32 %v631, 1.0
      %v633 = vrcp.pop %v632
      %s634 = scalar_lea.vmem %s272, 16
      %v635 = vld [vmem:[%s634] sm:$0xff]
      %v636 = vld [vmem:[%s634 + $0x8] sm:$0xff]
      %637 = vrot.lane.b32.xlu0 %v361, 106
      %v638 = vpop.permute.xlu0 %637
      %639 = vrot.lane.b32.xlu0 %v365, 106
      %v640 = vpop.permute.xlu0 %639
      %v641 = vsel %vm354, %v638, %v640
      %645 = vrot.lane.b32.xlu0 %v406, 126
      %v646 = vpop.permute.xlu0 %645
      %647 = vrot.lane.b32.xlu0 %v411, 126
      %v648 = vpop.permute.xlu0 %647
      %v649 = vsel %vm312, %v646, %v648
      %651 = vrot.lane.b32.xlu0 %v406, 118
      %v652 = vpop.permute.xlu0 %651
      %653 = vrot.lane.b32.xlu0 %v411, 118
      %v654 = vpop.permute.xlu0 %653
      %v655 = vsel %vm319, %v652, %v654
      %657 = vrot.lane.b32.xlu0 %v406, 117
      %v658 = vpop.permute.xlu0 %657
      %659 = vrot.lane.b32.xlu0 %v411, 117
      %v660 = vpop.permute.xlu0 %659
      %v661 = vsel %vm326, %v658, %v660
      %663 = vrot.lane.b32.xlu0 %v406, 116
      %v664 = vpop.permute.xlu0 %663
      %665 = vrot.lane.b32.xlu0 %v411, 116
      %v666 = vpop.permute.xlu0 %665
      %v667 = vsel %vm333, %v664, %v666
      %669 = vrot.lane.b32.xlu0 %v406, 108
      %v670 = vpop.permute.xlu0 %669
      %671 = vrot.lane.b32.xlu0 %v411, 108
      %v672 = vpop.permute.xlu0 %671
      %v673 = vsel %vm340, %v670, %v672
      %v677 = vunpack.c.l.b16 %v635
      %v678 = vunpack.c.l.b16 %v636
      %v679 = vpack.c.b16 %v678, %v677
      %680 = vrot.lane.b32.xlu0 %v679, 21
      %v681 = vpop.permute.xlu0 %680
      %v682 = vunpack.c.h.b16 %v635
      %v683 = vunpack.c.h.b16 %v636
      %v684 = vpack.c.b16 %v683, %v682
      %685 = vrot.lane.b32.xlu0 %v679, 20
      %v686 = vpop.permute.xlu0 %685
      %687 = vrot.lane.b32.xlu0 %v684, 20
      %v688 = vpop.permute.xlu0 %687
      %v689 = vsel %vm416, %v686, %v688
      %690 = vrot.lane.b32.xlu0 %v679, 19
      %v691 = vpop.permute.xlu0 %690
      %692 = vrot.lane.b32.xlu0 %v684, 19
      %v693 = vpop.permute.xlu0 %692
      %v694 = vsel %vm422, %v691, %v693
      %695 = vrot.lane.b32.xlu0 %v679, 11
      %v696 = vpop.permute.xlu0 %695
      %697 = vrot.lane.b32.xlu0 %v684, 11
      %v698 = vpop.permute.xlu0 %697
      %v699 = vsel %vm428, %v696, %v698
      %700 = vrot.lane.b32.xlu0 %v679, 10
      %v701 = vpop.permute.xlu0 %700
      %702 = vrot.lane.b32.xlu0 %v684, 10
      %v703 = vpop.permute.xlu0 %702
      %v704 = vsel %vm434, %v701, %v703
      %705 = vrot.lane.b32.xlu0 %v679, 9
      %v706 = vpop.permute.xlu0 %705
      %707 = vrot.lane.b32.xlu0 %v684, 9
      %v708 = vpop.permute.xlu0 %707
      %v709 = vsel %vm440, %v706, %v708
      %710 = vrot.lane.b32.xlu0 %v679, 1
      %v711 = vpop.permute.xlu0 %710
      %712 = vrot.lane.b32.xlu0 %v684, 1
      %v713 = vpop.permute.xlu0 %712
      %v714 = vsel %vm446, %v711, %v713
      %715 = vrot.lane.b32.xlu0 %v679, 127
      %v716 = vpop.permute.xlu0 %715
      %717 = vrot.lane.b32.xlu0 %v684, 127
      %v718 = vpop.permute.xlu0 %717
      %v719 = vsel %vm305, %v716, %v718
      %720 = vrot.lane.b32.xlu0 %v681, 107
      %v721 = vpop.permute.xlu0 %720
      %722 = vrot.lane.b32.xlu0 %v686, 107
      %v723 = vpop.permute.xlu0 %722
      %724 = vrot.lane.b32.xlu0 %v689, 107
      %v725 = vpop.permute.xlu0 %724
      %726 = vrot.lane.b32.xlu0 %v691, 107
      %v727 = vpop.permute.xlu0 %726
      %728 = vrot.lane.b32.xlu0 %v694, 107
      %v729 = vpop.permute.xlu0 %728
      %730 = vrot.lane.b32.xlu0 %v696, 107
      %v731 = vpop.permute.xlu0 %730
      %732 = vrot.lane.b32.xlu0 %v699, 107
      %v733 = vpop.permute.xlu0 %732
      %734 = vrot.lane.b32.xlu0 %v701, 107
      %v735 = vpop.permute.xlu0 %734
      %736 = vrot.lane.b32.xlu0 %v704, 107
      %v737 = vpop.permute.xlu0 %736
      %738 = vrot.lane.b32.xlu0 %v706, 107
      %v739 = vpop.permute.xlu0 %738
      %740 = vrot.lane.b32.xlu0 %v709, 107
      %v741 = vpop.permute.xlu0 %740
      %742 = vrot.lane.b32.xlu0 %v711, 107
      %v743 = vpop.permute.xlu0 %742
      %744 = vrot.lane.b32.xlu0 %v714, 107
      %v745 = vpop.permute.xlu0 %744
      %746 = vrot.lane.b32.xlu0 %v679, 107
      %v747 = vpop.permute.xlu0 %746
      %748 = vrot.lane.b32.xlu0 %v684, 107
      %v749 = vpop.permute.xlu0 %748
      %750 = vrot.lane.b32.xlu0 %v719, 107
      %v751 = vpop.permute.xlu0 %750
      %752 = vrot.lane.b32.xlu0 %v718, 107
      %v753 = vpop.permute.xlu0 %752
      %v754 = vsel %vm347, %v723, %v725
      %v755 = vsel %vm347, %v727, %v729
      %v756 = vsel %vm347, %v731, %v733
      %v757 = vsel %vm347, %v735, %v737
      %v758 = vsel %vm347, %v739, %v741
      %v759 = vsel %vm347, %v743, %v745
      %v760 = vsel %vm347, %v747, %v749
      %v761 = vsel %vm347, %v751, %v753
      %771 = vmatprep.subr.bf16.mxu0 0
      %772 = vmatpush1.bf16.msra.mxu0 %v361
      %773 = vmatprep.subr.bf16.mxu0 0
      %774 = vmatpush1.bf16.msra.mxu0 %v370
      %775 = vmatprep.subr.bf16.mxu0 0
      %776 = vmatpush1.bf16.msra.mxu0 %v376
      %777 = vmatprep.subr.bf16.mxu0 0
      %778 = vmatpush1.bf16.msra.mxu0 %v382
      %779 = vmatprep.subr.bf16.mxu0 0
      %780 = vmatpush1.bf16.msra.mxu0 %v388
      %781 = vmatprep.subr.bf16.mxu0 0
      %782 = vmatpush1.bf16.msra.mxu0 %v394
      %783 = vmatprep.subr.bf16.mxu0 0
      %784 = vmatpush1.bf16.msra.mxu0 %v400
      %785 = vmatprep.subr.bf16.mxu0 0
      %786 = vmatpush1.bf16.msra.mxu0 %v495
      %787 = vmatprep.subr.bf16.mxu0 0
      %788 = vmatpush1.bf16.msra.mxu0 %v641
      %789 = vmatprep.subr.bf16.mxu0 0
      %790 = vmatpush1.bf16.msra.mxu0 %v406
      %791 = vmatprep.subr.bf16.mxu0 0
      %792 = vmatpush1.bf16.msra.mxu0 %v452
      %793 = vmatprep.subr.bf16.mxu0 0
      %794 = vmatpush1.bf16.msra.mxu0 %v649
      %795 = vmatprep.subr.bf16.mxu0 0
      %796 = vmatpush1.bf16.msra.mxu0 %v655
      %797 = vmatprep.subr.bf16.mxu0 0
      %798 = vmatpush1.bf16.msra.mxu0 %v661
      %799 = vmatprep.subr.bf16.mxu0 0
      %800 = vmatpush1.bf16.msra.mxu0 %v667
      %801 = vmatprep.subr.bf16.mxu0 0
      %802 = vmatpush1.bf16.msra.mxu0 %v673
      %803 = vmatprep.mubr.bf16.mxu0 %v539
      %804 = vmatmul.mubr.bf16.gmra.mrb[0].mxu0 %v532
      %v805 = vpop.f32.mrb[0].mxu0
      %v806 = vadd.f32 %v516, %v805
      %v807 = vpop.f32.mrb[0].mxu0
      %v808 = vpop.f32.mrb[0].mxu0
      %v809 = vpop.f32.mrb[0].mxu0
      %810 = vdwg.mxu0
      %811 = vmatprep.subr.bf16.mxu0 0
      %812 = vmatpush1.bf16.msra.mxu0 %v503
      %813 = vmatprep.subr.bf16.mxu0 0
      %814 = vmatpush1.bf16.msra.mxu0 %v504
      %815 = vmatprep.subr.bf16.mxu0 0
      %816 = vmatpush1.bf16.msra.mxu0 %v721
      %817 = vmatprep.subr.bf16.mxu0 0
      %818 = vmatpush1.bf16.msra.mxu0 %v754
      %819 = vmatprep.subr.bf16.mxu0 0
      %820 = vmatpush1.bf16.msra.mxu0 %v755
      %821 = vmatprep.subr.bf16.mxu0 0
      %822 = vmatpush1.bf16.msra.mxu0 %v756
      %823 = vmatprep.subr.bf16.mxu0 0
      %824 = vmatpush1.bf16.msra.mxu0 %v757
      %825 = vmatprep.subr.bf16.mxu0 0
      %826 = vmatpush1.bf16.msra.mxu0 %v758
      %827 = vmatprep.subr.bf16.mxu0 0
      %828 = vmatpush1.bf16.msra.mxu0 %v759
      %829 = vmatprep.subr.bf16.mxu0 0
      %830 = vmatpush1.bf16.msra.mxu0 %v760
      %831 = vmatprep.subr.bf16.mxu0 0
      %832 = vmatpush1.bf16.msra.mxu0 %v761
      %833 = vmatprep.subr.bf16.mxu0 0
      %834 = vmatpush1.bf16.msra.mxu0 0
      %835 = vmatprep.subr.bf16.mxu0 0
      %836 = vmatpush1.bf16.msra.mxu0 0
      %837 = vmatprep.subr.bf16.mxu0 0
      %838 = vmatpush1.bf16.msra.mxu0 0
      %839 = vmatprep.subr.bf16.mxu0 0
      %840 = vmatpush1.bf16.msra.mxu0 0
      %841 = vmatprep.subr.bf16.mxu0 0
      %842 = vmatpush1.bf16.msra.mxu0 0
      %843 = vmatprep.mubr.bf16.mxu0 %v547
      %844 = vmatmul.mubr.bf16.gmra.mrb[0].mxu0 %v540
      %v845 = vpop.f32.mrb[0].mxu0
      %v846 = vadd.f32 %v806, %v845
      %v847 = vpop.f32.mrb[0].mxu0
      %v848 = vpop.f32.mrb[0].mxu0
      %v849 = vpop.f32.mrb[0].mxu0
      %850 = vdwg.mxu0
      %v851 = vsub.f32 0.0, %v846
      %v852 = vmul.f32 %v851, 1.442695
      %v853 = vpow.pop %v852
      %v854 = vadd.f32 %v853, 1.0
      %v855 = vrcp.pop %v854
      %v857 = vrot.slane %v855, 7
      %vm859 = vcmask 1040384
      %v860 = vsel %vm859, %v633, %v857
      %861 = vst [vmem:[%s281] sm:$0x3] %v860
      %p862 = scmp.lt.s32.totalorder %s20, 1
      %s863 = scalar_select %p862, %s20, 1
      %p864 = scmp.lt.s32.totalorder %s21, 0
      %s865 = scalar_select %p864, %s21, 0
      %s866 = sadd.s32 %s865, %s863
      %s867 = smul.addr %s866, 2
      %s868 = scalar_lea.vmem %s4, %s867
      // Predicated region
      $region37: #{aoc_top_forward.1} parent=35 // pred_check
        %p869 = pneg %p148
      $region38: #{aoc_top_forward.1} parent=35 // pred_check_branch
        %871 = sbr.rel (%p869) target = $region40
      $region39: #{aoc_top_forward.1} parent=35 // pred_region
        _
      $region40: #{aoc_top_forward.1} parent=35 // pred_fallthru
        _
    $region36: #{aoc_top_forward.1} parent=5 // pred_fallthru
      _
    %p872 = scmp.le.s32.totalorder 2, %s11
    // Predicated region
    $region41: #{aoc_top_forward.1} parent=5 // pred_check
      %p873 = pneg %p872
    $region42: #{aoc_top_forward.1} parent=5 // pred_check_branch
      %875 = sbr.rel (%p873) target = $region44
    $region43: #{aoc_top_forward.1} parent=5 // pred_region
      %s876 = ssub.s32 %s11, 2
      // Predicated region
      $region45: #{aoc_top_forward.1} parent=43 // pred_check
        %p877 = pneg %p154
      $region46: #{aoc_top_forward.1} parent=43 // pred_check_branch
        %879 = sbr.rel (%p877) target = $region48
      $region47: #{aoc_top_forward.1} parent=43 // pred_region
        %p880 = scmp.lt.s32.totalorder %s22, 1
        %s881 = scalar_select %p880, %s22, 1
        %p882 = scmp.lt.s32.totalorder %s23, 0
        %s883 = scalar_select %p882, %s23, 0
        %s884 = sadd.s32 %s883, %s881
        %s885 = smul.addr %s884, 2
        %s886 = scalar_lea.vmem %s4, %s885
      $region48: #{aoc_top_forward.1} parent=43 // pred_fallthru
        _
    $region44: #{aoc_top_forward.1} parent=5 // pred_fallthru
      _
  $region6: #{aoc_top_forward.1} parent=0 // loop_footer
    %s15 = sadd.s32 1, %s11
  $region7: #{aoc_top_forward.1} parent=0 // loop_footer_branch
    %10 = sbr.rel target = $region3
  $region8: #{aoc_top_forward.1} parent=0 // loop_exit
    _

</llo_original>
